<compile_context>
chip_gen: v5e
topology: v5e:2x2
jax: 0.10.0
libtpu: 0.0.40
codegen_flags: <defaults>
</compile_context>

<pallas_src>
import functools

import jax
import jax.numpy as jnp
from jax.experimental import pallas as pl
from jax.experimental.pallas import tpu as pltpu


# ---------------------------------------------------------------------------
# Fused per-batch kernel: pool + excite + scale, x[b] stays resident in VMEM.
# ---------------------------------------------------------------------------
def _se_fused_kernel(x_ref, w1_ref, w2t_ref, o_ref, *, inv_hw):
    # x_ref block: (1, C, HW); w1: (C, hidden); w2t: (C, hidden) == w2.T
    x = x_ref[0]                                              # (C, HW), native dtype

    # Squeeze: per-channel mean over the H*W lane dimension (f32 accumulation).
    pooled = jnp.sum(x.astype(jnp.float32), axis=-1, keepdims=True)       # (C, 1)
    pooled = pooled * jnp.float32(inv_hw)

    # Excitation (tiny, channel-mixing) — pure VPU broadcast + XLU reduce.
    w1 = w1_ref[...].astype(jnp.float32)                      # (C, hidden)
    w2t = w2t_ref[...].astype(jnp.float32)                    # (C, hidden)
    z = jnp.sum(w1 * pooled, axis=0, keepdims=True)           # (1, hidden) = y @ W1
    z = jnp.maximum(z, 0.0)                                   # ReLU
    s = jnp.sum(w2t * z, axis=-1, keepdims=True)              # (C, 1)     = z @ W2
    s = 1.0 / (1.0 + jnp.exp(-s))                             # sigmoid (EUP)

    # Scale: broadcast the per-channel gate across H*W lanes.
    o_ref[0] = x * s.astype(x.dtype)


# ---------------------------------------------------------------------------
# Fallback kernels (tiled 3-pass path, used only if a per-batch slab is huge).
# ---------------------------------------------------------------------------
def _pool_kernel(x_ref, o_ref, *, inv_hw):
    x = x_ref[...].astype(jnp.float32)
    o_ref[...] = jnp.sum(x, axis=-1, keepdims=True) * jnp.float32(inv_hw)


def _excite_kernel(p_ref, w1_ref, w2_ref, o_ref):
    y = p_ref[...].astype(jnp.float32)
    z = jnp.dot(y, w1_ref[...].astype(jnp.float32),
                preferred_element_type=jnp.float32)
    z = jnp.maximum(z, 0.0)
    s = jnp.dot(z, w2_ref[...].astype(jnp.float32),
                preferred_element_type=jnp.float32)
    o_ref[...] = (1.0 / (1.0 + jnp.exp(-s))).astype(o_ref.dtype)


def _scale_kernel(x_ref, s_ref, o_ref):
    o_ref[...] = (x_ref[...] * s_ref[...]).astype(o_ref.dtype)


def _row_tile(rows, hw, itemsize, target_bytes=2 * 1024 * 1024):
    """Pick a row tile so one (tr, hw) block is ~2 MiB and TPU-legal."""
    tr = max(1, target_bytes // max(1, hw * itemsize))
    if tr >= rows:
        return rows                      # block == full array dims: always legal
    return max(8, (tr // 8) * 8)         # second-to-last block dim must be % 8


def _se_tiled(x2, w1, w2, B, C, HW):
    rows = B * C
    itemsize = jnp.dtype(x2.dtype).itemsize
    tr = _row_tile(rows, HW, itemsize)
    grid = (pl.cdiv(rows, tr),)
    par = pltpu.CompilerParams(dimension_semantics=("parallel",))

    pooled = pl.pallas_call(
        functools.partial(_pool_kernel, inv_hw=1.0 / HW),
        out_shape=jax.ShapeDtypeStruct((rows, 1), jnp.float32),
        grid=grid,
        in_specs=[pl.BlockSpec((tr, HW), lambda i: (i, 0))],
        out_specs=pl.BlockSpec((tr, 1), lambda i: (i, 0)),
        compiler_params=par,
    )(x2)

    hidden = w1.shape[1]
    scales = pl.pallas_call(
        _excite_kernel,
        out_shape=jax.ShapeDtypeStruct((B, C), jnp.float32),
        in_specs=[
            pl.BlockSpec((B, C), lambda: (0, 0)),
            pl.BlockSpec((C, hidden), lambda: (0, 0)),
            pl.BlockSpec((hidden, C), lambda: (0, 0)),
        ],
        out_specs=pl.BlockSpec((B, C), lambda: (0, 0)),
    )(pooled.reshape(B, C), w1, w2)

    s2 = scales.reshape(rows, 1).astype(x2.dtype)
    return pl.pallas_call(
        _scale_kernel,
        out_shape=jax.ShapeDtypeStruct((rows, HW), x2.dtype),
        grid=grid,
        in_specs=[
            pl.BlockSpec((tr, HW), lambda i: (i, 0)),
            pl.BlockSpec((tr, 1), lambda i: (i, 0)),
        ],
        out_specs=pl.BlockSpec((tr, HW), lambda i: (i, 0)),
        compiler_params=par,
    )(x2, s2)


# ---------------------------------------------------------------------------
# Wrapper
# ---------------------------------------------------------------------------
def se_block(x, w1, w2):
    """SEBlock forward.

    x : (B, C, H, W)
    w1: (C, C//r)  == fc1.weight.T  (bias-free)
    w2: (C//r, C)  == fc2.weight.T  (bias-free)
    """
    B, C, H, W = x.shape
    HW = H * W
    hidden = w1.shape[1]
    itemsize = jnp.dtype(x.dtype).itemsize

    # One per-batch slab in f32 working precision; keep the fused path while it
    # fits comfortably inside scoped VMEM (double-buffered in/out + temps).
    slab_f32_bytes = C * HW * 4
    if slab_f32_bytes <= 2 * 1024 * 1024:
        x3 = x.reshape(B, C, HW)              # contiguous -> metadata-only reshape
        w2t = jnp.transpose(w2)               # (C, hidden), tiny one-time op
        out3 = pl.pallas_call(
            functools.partial(_se_fused_kernel, inv_hw=1.0 / HW),
            out_shape=jax.ShapeDtypeStruct((B, C, HW), x.dtype),
            grid=(B,),
            in_specs=[
                pl.BlockSpec((1, C, HW), lambda b: (b, 0, 0)),
                pl.BlockSpec((C, hidden), lambda b: (0, 0)),
                pl.BlockSpec((C, hidden), lambda b: (0, 0)),
            ],
            out_specs=pl.BlockSpec((1, C, HW), lambda b: (b, 0, 0)),
            compiler_params=pltpu.CompilerParams(
                dimension_semantics=("parallel",)),
        )(x3, w1, w2t)
        return out3.reshape(B, C, H, W)

    # Fallback: tiled 3-pass path for very large per-batch feature maps.
    del itemsize
    out2 = _se_tiled(x.reshape(B * C, HW), w1, w2, B, C, HW)
    return out2.reshape(B, C, H, W)


def _se_reference(x, w1, w2):
    y = jnp.mean(x.astype(jnp.float32), axis=(2, 3))
    z = jnp.maximum(jnp.dot(y, w1.astype(jnp.float32),
                            preferred_element_type=jnp.float32), 0.0)
    s = jax.nn.sigmoid(jnp.dot(z, w2.astype(jnp.float32),
                               preferred_element_type=jnp.float32))
    return (x.astype(jnp.float32) * s[:, :, None, None]).astype(x.dtype)


if __name__ == "__main__":
    key = jax.random.PRNGKey(0)
    kx, k1, k2 = jax.random.split(key, 3)

    # CIFAR-style feature map; channels=64 so reduction=16 gives hidden=4.
    B, C, H, W = 2, 64, 16, 16
    reduction = 16
    hidden = C // reduction

    x = jax.random.normal(kx, (B, C, H, W), dtype=jnp.float32)
    w1 = 0.1 * jax.random.normal(k1, (C, hidden), dtype=jnp.float32)   # fc1.weight.T
    w2 = 0.1 * jax.random.normal(k2, (hidden, C), dtype=jnp.float32)   # fc2.weight.T

    y = jax.block_until_ready(se_block(x, w1, w2))
    y_ref = _se_reference(x, w1, w2)

    assert y.shape == x.shape and y.dtype == x.dtype
    assert bool(jnp.allclose(y, y_ref, rtol=1e-3, atol=1e-3)), \
        "SEBlock kernel output mismatch vs reference"

    print("KERNEL_OK")
</pallas_src>

<mosaic_0001>
module attributes {stable_mosaic.version = 11 : i64} {
  func.func @_se_fused_kernel(%arg0: i32, %arg1: memref<1x64x256xf32, #tpu.memory_space<vmem>>, %arg2: memref<64x4xf32, #tpu.memory_space<vmem>>, %arg3: memref<64x4xf32, #tpu.memory_space<vmem>>, %arg4: memref<1x64x256xf32, #tpu.memory_space<vmem>>) attributes {dimension_semantics = [#tpu.dimension_semantics<parallel>], iteration_bounds = array<i64: 2>, scalar_prefetch = 0 : i64, scratch_operands = 0 : i64, tpu.core_type = #tpu.core_type<tc>, window_params = [{transform_indices = @transform_0, window_bounds = array<i64: 1, 64, 256>}, {pipeline_mode = #tpu.pipeline_mode<synchronous>, transform_indices = @transform_1, window_bounds = array<i64: 64, 4>}, {pipeline_mode = #tpu.pipeline_mode<synchronous>, transform_indices = @transform_2, window_bounds = array<i64: 64, 4>}, {transform_indices = @transform_3, window_bounds = array<i64: 1, 64, 256>}]} {
    %c0 = arith.constant 0 : index
    %c0_0 = arith.constant 0 : index
    %c0_1 = arith.constant 0 : index
    %0 = vector.load %arg1[%c0, %c0_0, %c0_1] : memref<1x64x256xf32, #tpu.memory_space<vmem>>, vector<1x64x256xf32>
    %1 = vector.shape_cast %0 : vector<1x64x256xf32> to vector<64x256xf32>
    %cst = arith.constant dense<0.000000e+00> : vector<64xf32>
    %2 = vector.multi_reduction <add>, %1, %cst [1] : vector<64x256xf32> to vector<64xf32>
    %3 = vector.shape_cast %2 : vector<64xf32> to vector<64x1xf32>
    %cst_2 = arith.constant 3.906250e-03 : f32
    %4 = vector.broadcast %cst_2 : f32 to vector<64x1xf32>
    %5 = arith.mulf %3, %4 : vector<64x1xf32>
    %c0_3 = arith.constant 0 : index
    %c0_4 = arith.constant 0 : index
    %6 = vector.load %arg2[%c0_3, %c0_4] : memref<64x4xf32, #tpu.memory_space<vmem>>, vector<64x4xf32>
    %c0_5 = arith.constant 0 : index
    %c0_6 = arith.constant 0 : index
    %7 = vector.load %arg3[%c0_5, %c0_6] : memref<64x4xf32, #tpu.memory_space<vmem>>, vector<64x4xf32>
    %8 = vector.broadcast %5 : vector<64x1xf32> to vector<64x4xf32>
    %9 = arith.mulf %6, %8 : vector<64x4xf32>
    %cst_7 = arith.constant dense<0.000000e+00> : vector<4xf32>
    %10 = vector.multi_reduction <add>, %9, %cst_7 [0] : vector<64x4xf32> to vector<4xf32>
    %11 = vector.shape_cast %10 : vector<4xf32> to vector<1x4xf32>
    %cst_8 = arith.constant 0.000000e+00 : f32
    %12 = vector.broadcast %cst_8 : f32 to vector<1x4xf32>
    %13 = arith.maximumf %11, %12 : vector<1x4xf32>
    %14 = vector.broadcast %13 : vector<1x4xf32> to vector<64x4xf32>
    %15 = arith.mulf %7, %14 : vector<64x4xf32>
    %cst_9 = arith.constant dense<0.000000e+00> : vector<64xf32>
    %16 = vector.multi_reduction <add>, %15, %cst_9 [1] : vector<64x4xf32> to vector<64xf32>
    %17 = vector.shape_cast %16 : vector<64xf32> to vector<64x1xf32>
    %cst_10 = arith.constant 0.000000e+00 : f32
    %18 = vector.broadcast %cst_10 : f32 to vector<64x1xf32>
    %19 = arith.subf %18, %17 : vector<64x1xf32>
    %20 = math.exp %19 : vector<64x1xf32>
    %cst_11 = arith.constant 1.000000e+00 : f32
    %21 = vector.broadcast %cst_11 : f32 to vector<64x1xf32>
    %22 = arith.addf %21, %20 : vector<64x1xf32>
    %cst_12 = arith.constant 1.000000e+00 : f32
    %23 = vector.broadcast %cst_12 : f32 to vector<64x1xf32>
    %24 = arith.divf %23, %22 : vector<64x1xf32>
    %25 = vector.broadcast %24 : vector<64x1xf32> to vector<64x256xf32>
    %26 = arith.mulf %1, %25 : vector<64x256xf32>
    %c0_13 = arith.constant 0 : index
    %c0_14 = arith.constant 0 : index
    %c0_15 = arith.constant 0 : index
    %27 = vector.load %arg4[%c0_13, %c0_14, %c0_15] : memref<1x64x256xf32, #tpu.memory_space<vmem>>, vector<1x64x256xf32>
    %28 = vector.shape_cast %27 : vector<1x64x256xf32> to vector<64x256xf32>
    %29 = vector.shape_cast %26 : vector<64x256xf32> to vector<1x64x256xf32>
    tpu.vector_store %arg4[%c0_13, %c0_14, %c0_15], %29 {strides = array<i32>} : memref<1x64x256xf32, #tpu.memory_space<vmem>>, vector<1x64x256xf32>,
    return
  }
  func.func @transform_0(%arg0: i32) -> (i32, i32, i32) {
    %c0_i32 = arith.constant 0 : i32
    %c0_i32_0 = arith.constant 0 : i32
    %c0_i32_1 = arith.constant 0 : i32
    return %arg0, %c0_i32, %c0_i32_0 : i32, i32, i32
  }
  func.func @transform_1(%arg0: i32) -> (i32, i32) {
    %c0_i32 = arith.constant 0 : i32
    %c0_i32_0 = arith.constant 0 : i32
    %c0_i32_1 = arith.constant 0 : i32
    return %c0_i32, %c0_i32_0 : i32, i32
  }
  func.func @transform_2(%arg0: i32) -> (i32, i32) {
    %c0_i32 = arith.constant 0 : i32
    %c0_i32_0 = arith.constant 0 : i32
    %c0_i32_1 = arith.constant 0 : i32
    return %c0_i32, %c0_i32_0 : i32, i32
  }
  func.func @transform_3(%arg0: i32) -> (i32, i32, i32) {
    %c0_i32 = arith.constant 0 : i32
    %c0_i32_0 = arith.constant 0 : i32
    %c0_i32_1 = arith.constant 0 : i32
    return %arg0, %c0_i32, %c0_i32_0 : i32, i32, i32
  }
}

</mosaic_0001>

<llo_original>
// kernel: tpu_custom_call.1
$region0: #{tpu_custom_call.1}
  #allocation0 [shape = 'u32[]', space=smem, size = 0x4, offset = 0x4, fixed_abs, tag = 'smem constant byte address 0x4 - core index']
  #allocation1 [shape = 'u32[72,128]{1,0:T(1,128)}', space=vmem, size = 0x9000, scoped, tag = 'internal scratch']
  %s0 = inlined_call_operand.hbm [shape: f32[2,64,256], index: 0, kind: input, shape index: {}]
  %s1 = inlined_call_operand.vmem [shape: f32[64,4], index: 1, kind: input, shape index: {}]
  %s2 = inlined_call_operand.vmem [shape: f32[64,4], index: 2, kind: input, shape index: {}]
  %s3 = inlined_call_operand.hbm [shape: f32[2,64,256], index: 3, kind: output, shape index: {}]
  %s4 = sld [smem:[#allocation0]]
  $region49: #{tpu_custom_call.1} parent=0
    _
  %s6 = ssub.s32 1, %s4
  %s7 = scalar_select 0, %s6, %s4
  $region1: #{tpu_custom_call.1} parent=0
    #allocation2 [shape = 'u8[131072]{0}', space=vmem, size = 0x20000, scoped, tag = 'input window, operand 0']
    #allocation3 [shape = 's32[2]{0}', space=sflag, size = 0x8, scoped, tag = 'scoped memory for tpu_custom_call.1']
    #allocation4 [shape = 's32[2]{0}', space=sflag, size = 0x8, scoped, tag = 'scoped memory for tpu_custom_call.1']
    #allocation5 [shape = 'u8[131072]{0}', space=vmem, size = 0x20000, scoped, tag = 'output window, operand 0']
    %8 = vsyncpa [#allocation3], 0
    %s9 = scalar_lea.sflag [#allocation3], 1
    %10 = vsyncpa %s9, 0
    %11 = vsyncpa [#allocation4], 0
    %s12 = scalar_lea.sflag [#allocation4], 1
    %13 = vsyncpa %s12, 0
    loop: start=0, step=1, limit=4
    $region2: #{tpu_custom_call.1} parent=1 // loop_pre_header
      _
    $region3: #{tpu_custom_call.1} parent=1 // loop_header
      %s15 = sphi 0, %s19
      %p16 = scmp.ge.s32.totalorder %s15, 4
      %s25 = sphi 0, %s27
      %s28 = sphi 0, %s25
      %s29 = sphi 0, %s28
      %s45 = sphi 0, %s29
      %s49 = sphi 0, %s49
      %s51 = sphi 0, %s49
      %s52 = sphi 0, %s51
      %s66 = sphi 0, %s52
      %s70 = sphi 0, %s70
      %s72 = sphi 0, %s70
      %s73 = sphi 0, %s72
      %s87 = sphi 0, %s73
      %s93 = sphi 0, %s95
      %s96 = sphi 0, %s93
      %s97 = sphi 0, %s96
      %s113 = sphi 0, %s97
    $region4: #{tpu_custom_call.1} parent=1 // loop_header_branch
      %18 = sbr.rel (%p16) target = $region8
    $region5: #{tpu_custom_call.1} parent=1 // loop_body
      %s20 = ssub.s32 %s15, 1
      %s21 = ssub.s32 %s15, 2
      %s22 = sadd.s32 %s15, 1
      %s23 = ssub.s32 %s15, %s22
      %p24 = scmp.eq.s32.totalorder %s23, 0
      %s26 = sadd.s32 %s25, 1
      %s27 = scalar_select %p24, %s25, %s26
      %p30 = pneg %p24
      %p31 = scmp.eq.s32.totalorder %s15, 1
      %p32 = por %p30, %p31
      %p33 = scmp.ne.s32.totalorder %s25, %s28
      %p34 = scmp.eq.s32.totalorder %s15, 0
      %p35 = por %p33, %p34
      %p36 = scmp.ne.s32.totalorder %s25, %s28
      %p37 = scmp.eq.s32.totalorder %s20, 1
      %p38 = por %p36, %p37
      %p39 = scmp.ne.s32.totalorder %s28, %s29
      %p40 = scmp.eq.s32.totalorder %s20, 0
      %p41 = por %p39, %p40
      %p42 = scmp.ne.s32.totalorder %s28, %s29
      %p43 = scmp.eq.s32.totalorder %s21, 1
      %p44 = por %p42, %p43
      %p46 = scmp.ne.s32.totalorder %s29, %s45
      %p47 = scmp.eq.s32.totalorder %s21, 0
      %p48 = por %p46, %p47
      %s50 = sadd.s32 %s49, 1
      %p53 = scmp.eq.s32.totalorder %s15, 1
      %p54 = scmp.ne.s32.totalorder %s49, %s51
      %p55 = scmp.eq.s32.totalorder %s15, 0
      %p56 = por %p54, %p55
      %p57 = scmp.ne.s32.totalorder %s49, %s51
      %p58 = scmp.eq.s32.totalorder %s20, 1
      %p59 = por %p57, %p58
      %p60 = scmp.ne.s32.totalorder %s51, %s52
      %p61 = scmp.eq.s32.totalorder %s20, 0
      %p62 = por %p60, %p61
      %p63 = scmp.ne.s32.totalorder %s51, %s52
      %p64 = scmp.eq.s32.totalorder %s21, 1
      %p65 = por %p63, %p64
      %p67 = scmp.ne.s32.totalorder %s52, %s66
      %p68 = scmp.eq.s32.totalorder %s21, 0
      %p69 = por %p67, %p68
      %s71 = sadd.s32 %s70, 1
      %p74 = scmp.eq.s32.totalorder %s15, 1
      %p75 = scmp.ne.s32.totalorder %s70, %s72
      %p76 = scmp.eq.s32.totalorder %s15, 0
      %p77 = por %p75, %p76
      %p78 = scmp.ne.s32.totalorder %s70, %s72
      %p79 = scmp.eq.s32.totalorder %s20, 1
      %p80 = por %p78, %p79
      %p81 = scmp.ne.s32.totalorder %s72, %s73
      %p82 = scmp.eq.s32.totalorder %s20, 0
      %p83 = por %p81, %p82
      %p84 = scmp.ne.s32.totalorder %s72, %s73
      %p85 = scmp.eq.s32.totalorder %s21, 1
      %p86 = por %p84, %p85
      %p88 = scmp.ne.s32.totalorder %s73, %s87
      %p89 = scmp.eq.s32.totalorder %s21, 0
      %p90 = por %p88, %p89
      %s91 = ssub.s32 %s15, %s22
      %p92 = scmp.eq.s32.totalorder %s91, 0
      %s94 = sadd.s32 %s93, 1
      %s95 = scalar_select %p92, %s93, %s94
      %p98 = pneg %p92
      %p99 = scmp.eq.s32.totalorder %s15, 1
      %p100 = por %p98, %p99
      %p101 = scmp.ne.s32.totalorder %s93, %s96
      %p102 = scmp.eq.s32.totalorder %s15, 0
      %p103 = por %p101, %p102
      %p104 = scmp.ne.s32.totalorder %s93, %s96
      %p105 = scmp.eq.s32.totalorder %s20, 1
      %p106 = por %p104, %p105
      %p107 = scmp.ne.s32.totalorder %s96, %s97
      %p108 = scmp.eq.s32.totalorder %s20, 0
      %p109 = por %p107, %p108
      %p110 = scmp.ne.s32.totalorder %s96, %s97
      %p111 = scmp.eq.s32.totalorder %s21, 1
      %p112 = por %p110, %p111
      %p114 = scmp.ne.s32.totalorder %s97, %s113
      %p115 = scmp.eq.s32.totalorder %s21, 0
      %p116 = por %p114, %p115
      %p117 = scmp.le.s32.totalorder 1, %s15
      %p118 = scmp.lt.s32.totalorder %s15, 3
      %p119 = pnand %p117, %p118
      %p120 = pneg %p119
      // Predicated region
      $region9: #{tpu_custom_call.1} parent=5 // pred_check
        _
      $region10: #{tpu_custom_call.1} parent=5 // pred_check_branch
        %122 = sbr.rel (%p119) target = $region12
      $region11: #{tpu_custom_call.1} parent=5 // pred_region
        %s123 = ssub.s32 %s15, 1
        // Predicated region
        $region13: #{tpu_custom_call.1} parent=11 // pred_check
          %p124 = pneg %p62
        $region14: #{tpu_custom_call.1} parent=11 // pred_check_branch
          %126 = sbr.rel (%p124) target = $region16
        $region15: #{tpu_custom_call.1} parent=11 // pred_region
          _
        $region16: #{tpu_custom_call.1} parent=11 // pred_fallthru
          _
        // Predicated region
        $region17: #{tpu_custom_call.1} parent=11 // pred_check
          %p127 = pneg %p83
        $region18: #{tpu_custom_call.1} parent=11 // pred_check_branch
          %129 = sbr.rel (%p127) target = $region20
        $region19: #{tpu_custom_call.1} parent=11 // pred_region
          _
        $region20: #{tpu_custom_call.1} parent=11 // pred_fallthru
          _
      $region12: #{tpu_custom_call.1} parent=5 // pred_fallthru
        _
      %p130 = scmp.lt.s32.totalorder %s15, 2
      // Predicated region
      $region21: #{tpu_custom_call.1} parent=5 // pred_check
        %p131 = pneg %p130
      $region22: #{tpu_custom_call.1} parent=5 // pred_check_branch
        %133 = sbr.rel (%p131) target = $region24
      $region23: #{tpu_custom_call.1} parent=5 // pred_region
        // Predicated region
        $region25: #{tpu_custom_call.1} parent=23 // pred_check
          %p134 = pneg %p35
        $region26: #{tpu_custom_call.1} parent=23 // pred_check_branch
          %136 = sbr.rel (%p134) target = $region28
        $region27: #{tpu_custom_call.1} parent=23 // pred_region
          %s137 = sand.u32 %s25, 1
          %s138 = scalar_lea.sflag [#allocation3], %s137
          %s139 = sand.u32 %s25, 1
          %s140 = smul.addr %s139, 128
          %s141 = scalar_lea.vmem [#allocation2], %s140
          %143 = vsyncadd %s138, 0
          %s144 = smul.addr %s15, 16
          %s145 = smul.addr %s144, 8
          %s146 = scalar_lea.hbm %s0, %s145
          %s147 = sshll.u32 %s146, 4
          %s148 = int_to_ptr.hbm [resolvable:$true] %s147
          %s149 = sshll.u32 %s141, 4
          %s150 = int_to_ptr.vmem [resolvable:$true] %s149
          %155 = dma.hbm_to_vmem [thread:$0]  %s148, 2048, %s150, %s138, 256, 256, 16
        $region28: #{tpu_custom_call.1} parent=23 // pred_fallthru
          _
      $region24: #{tpu_custom_call.1} parent=5 // pred_fallthru
        _
      %p156 = scmp.le.s32.totalorder 1, %s15
      %p157 = scmp.lt.s32.totalorder %s15, 3
      %p158 = pnand %p156, %p157
      %p159 = pneg %p158
      // Predicated region
      $region29: #{tpu_custom_call.1} parent=5 // pred_check
        _
      $region30: #{tpu_custom_call.1} parent=5 // pred_check_branch
        %161 = sbr.rel (%p158) target = $region32
      $region31: #{tpu_custom_call.1} parent=5 // pred_region
        %s162 = ssub.s32 %s15, 1
        %s163 = sand.u32 %s28, 1
        %s164 = scalar_lea.sflag [#allocation3], %s163
        %s165 = sand.u32 %s28, 1
        %s166 = smul.addr %s165, 128
        %s167 = scalar_lea.vmem [#allocation2], %s166
        // Predicated region
        $region33: #{tpu_custom_call.1} parent=31 // pred_check
          %p168 = pneg %p41
        $region34: #{tpu_custom_call.1} parent=31 // pred_check_branch
          %170 = sbr.rel (%p168) target = $region36
        $region35: #{tpu_custom_call.1} parent=31 // pred_region
          %172 = dma.done %s164, 2048
        $region36: #{tpu_custom_call.1} parent=31 // pred_fallthru
          _
        %s173 = sand.u32 %s28, 1
        %s174 = scalar_lea.sflag [#allocation3], %s173
        %s175 = sand.u32 %s28, 1
        %s176 = smul.addr %s175, 128
        %s177 = scalar_lea.vmem [#allocation2], %s176
        %p178 = pneg %p41
        %p179 = pneg %p38
        %p180 = pneg %p62
        %p181 = pneg %p59
        %p182 = pneg %p83
        %p183 = pneg %p80
        %p184 = pneg %p109
        %p185 = pneg %p106
        %s186 = sand.u32 %s96, 1
        %s187 = scalar_lea.sflag [#allocation4], %s186
        %s188 = sand.u32 %s96, 1
        %s189 = smul.addr %s188, 128
        %s190 = scalar_lea.vmem [#allocation5], %s189
        %v191 = vld [vmem:[%s167] sm:$0xff]
        %v192 = vld [vmem:[%s167 + $0x8] sm:$0xff]
        %v193 = vld [vmem:[%s167 + $0x10] sm:$0xff]
        %v194 = vld [vmem:[%s167 + $0x18] sm:$0xff]
        %v195 = vld [vmem:[%s167 + $0x20] sm:$0xff]
        %v196 = vld [vmem:[%s167 + $0x28] sm:$0xff]
        %v197 = vld [vmem:[%s167 + $0x30] sm:$0xff]
        %v198 = vld [vmem:[%s167 + $0x38] sm:$0xff]
        %v199 = vld [vmem:[%s167 + $0x40] sm:$0xff]
        %v200 = vld [vmem:[%s167 + $0x48] sm:$0xff]
        %v201 = vld [vmem:[%s167 + $0x50] sm:$0xff]
        %v202 = vld [vmem:[%s167 + $0x58] sm:$0xff]
        %v203 = vld [vmem:[%s167 + $0x60] sm:$0xff]
        %v204 = vld [vmem:[%s167 + $0x68] sm:$0xff]
        %v205 = vld [vmem:[%s167 + $0x70] sm:$0xff]
        %v206 = vld [vmem:[%s167 + $0x78] sm:$0xff]
        %v207 = vadd.f32 %v191, %v192
        %208 = vadd.xlane.f32.xlu0 %v207
        %v209 = vpop.xlane.xlu0 %208
        %v210 = vadd.f32 %v193, %v194
        %211 = vadd.xlane.f32.xlu0 %v210
        %v212 = vpop.xlane.xlu0 %211
        %v213 = vadd.f32 %v195, %v196
        %214 = vadd.xlane.f32.xlu0 %v213
        %v215 = vpop.xlane.xlu0 %214
        %v216 = vadd.f32 %v197, %v198
        %217 = vadd.xlane.f32.xlu0 %v216
        %v218 = vpop.xlane.xlu0 %217
        %v219 = vadd.f32 %v199, %v200
        %220 = vadd.xlane.f32.xlu0 %v219
        %v221 = vpop.xlane.xlu0 %220
        %v222 = vadd.f32 %v201, %v202
        %223 = vadd.xlane.f32.xlu0 %v222
        %v224 = vpop.xlane.xlu0 %223
        %v225 = vadd.f32 %v203, %v204
        %226 = vadd.xlane.f32.xlu0 %v225
        %v227 = vpop.xlane.xlu0 %226
        %v228 = vadd.f32 %v205, %v206
        %229 = vadd.xlane.f32.xlu0 %v228
        %v230 = vpop.xlane.xlu0 %229
        %v231 = vmul.f32 %v209, 0.00390625
        %v232 = vmul.f32 %v212, 0.00390625
        %v233 = vmul.f32 %v215, 0.00390625
        %v234 = vmul.f32 %v218, 0.00390625
        %v235 = vmul.f32 %v221, 0.00390625
        %v236 = vmul.f32 %v224, 0.00390625
        %v237 = vmul.f32 %v227, 0.00390625
        %v238 = vmul.f32 %v230, 0.00390625
        %v239 = vld [vmem:[%s1] sm:$0xff]
        %v240 = vld [vmem:[%s1 + $0x8] sm:$0xff]
        %v241 = vld [vmem:[%s1 + $0x10] sm:$0xff]
        %v242 = vld [vmem:[%s1 + $0x18] sm:$0xff]
        %v243 = vld [vmem:[%s1 + $0x20] sm:$0xff]
        %v244 = vld [vmem:[%s1 + $0x28] sm:$0xff]
        %v245 = vld [vmem:[%s1 + $0x30] sm:$0xff]
        %v246 = vld [vmem:[%s1 + $0x38] sm:$0xff]
        %v247 = vld [vmem:[%s2] sm:$0xff]
        %v248 = vld [vmem:[%s2 + $0x8] sm:$0xff]
        %v249 = vld [vmem:[%s2 + $0x10] sm:$0xff]
        %v250 = vld [vmem:[%s2 + $0x18] sm:$0xff]
        %v251 = vld [vmem:[%s2 + $0x20] sm:$0xff]
        %v252 = vld [vmem:[%s2 + $0x28] sm:$0xff]
        %v253 = vld [vmem:[%s2 + $0x30] sm:$0xff]
        %v254 = vld [vmem:[%s2 + $0x38] sm:$0xff]
        %v255 = vmul.f32 %v239, %v231
        %v256 = vmul.f32 %v240, %v232
        %v257 = vmul.f32 %v241, %v233
        %v258 = vmul.f32 %v242, %v234
        %v259 = vmul.f32 %v243, %v235
        %v260 = vmul.f32 %v244, %v236
        %v261 = vmul.f32 %v245, %v237
        %v262 = vmul.f32 %v246, %v238
        %vm263 = vcmask 31744
        %v264 = vsel %vm263, %v255, 0.0
        %v265 = vsel %vm263, %v256, 0.0
        %v266 = vadd.f32 %v264, %v265
        %v267 = vsel %vm263, %v257, 0.0
        %v268 = vadd.f32 %v266, %v267
        %v269 = vsel %vm263, %v258, 0.0
        %v270 = vadd.f32 %v268, %v269
        %v271 = vsel %vm263, %v259, 0.0
        %v272 = vadd.f32 %v270, %v271
        %v273 = vsel %vm263, %v260, 0.0
        %v274 = vadd.f32 %v272, %v273
        %v275 = vsel %vm263, %v261, 0.0
        %v276 = vadd.f32 %v274, %v275
        %v277 = vsel %vm263, %v262, 0.0
        %v278 = vadd.f32 %v276, %v277
        %v279 = vrot.slane %v278, 4
        %v280 = vadd.f32 %v278, %v279
        %v281 = vrot.slane %v280, 2
        %v282 = vadd.f32 %v280, %v281
        %v283 = vrot.slane %v282, 1
        %v284 = vadd.f32 %v282, %v283
        %v285 = vmax.f32 %v284, 0.0
        %v286 = vmul.f32 %v247, %v285
        %v287 = vmul.f32 %v248, %v285
        %v288 = vmul.f32 %v249, %v285
        %v289 = vmul.f32 %v250, %v285
        %v290 = vmul.f32 %v251, %v285
        %v291 = vmul.f32 %v252, %v285
        %v292 = vmul.f32 %v253, %v285
        %v293 = vmul.f32 %v254, %v285
        %v294 = vsel %vm263, %v286, 0.0
        %295 = vadd.xlane.f32.xlu0 %v294
        %v296 = vpop.xlane.xlu0 %295
        %v297 = vsel %vm263, %v287, 0.0
        %298 = vadd.xlane.f32.xlu0 %v297
        %v299 = vpop.xlane.xlu0 %298
        %v300 = vsel %vm263, %v288, 0.0
        %301 = vadd.xlane.f32.xlu0 %v300
        %v302 = vpop.xlane.xlu0 %301
        %v303 = vsel %vm263, %v289, 0.0
        %304 = vadd.xlane.f32.xlu0 %v303
        %v305 = vpop.xlane.xlu0 %304
        %v306 = vsel %vm263, %v290, 0.0
        %307 = vadd.xlane.f32.xlu0 %v306
        %v308 = vpop.xlane.xlu0 %307
        %v309 = vsel %vm263, %v291, 0.0
        %310 = vadd.xlane.f32.xlu0 %v309
        %v311 = vpop.xlane.xlu0 %310
        %v312 = vsel %vm263, %v292, 0.0
        %313 = vadd.xlane.f32.xlu0 %v312
        %v314 = vpop.xlane.xlu0 %313
        %v315 = vsel %vm263, %v293, 0.0
        %316 = vadd.xlane.f32.xlu0 %v315
        %v317 = vpop.xlane.xlu0 %316
        %v318 = vsub.f32 0.0, %v296
        %v319 = vsub.f32 0.0, %v299
        %v320 = vsub.f32 0.0, %v302
        %v321 = vsub.f32 0.0, %v305
        %v322 = vsub.f32 0.0, %v308
        %v323 = vsub.f32 0.0, %v311
        %v324 = vsub.f32 0.0, %v314
        %v325 = vsub.f32 0.0, %v317
        %v326 = vmul.f32 %v318, 1.442695
        %v327 = vpow.pop %v326
        %v328 = vmul.f32 %v319, 1.442695
        %v329 = vpow.pop %v328
        %v330 = vmul.f32 %v320, 1.442695
        %v331 = vpow.pop %v330
        %v332 = vmul.f32 %v321, 1.442695
        %v333 = vpow.pop %v332
        %v334 = vmul.f32 %v322, 1.442695
        %v335 = vpow.pop %v334
        %v336 = vmul.f32 %v323, 1.442695
        %v337 = vpow.pop %v336
        %v338 = vmul.f32 %v324, 1.442695
        %v339 = vpow.pop %v338
        %v340 = vmul.f32 %v325, 1.442695
        %v341 = vpow.pop %v340
        %v342 = vadd.f32 %v327, 1.0
        %v343 = vadd.f32 %v329, 1.0
        %v344 = vadd.f32 %v331, 1.0
        %v345 = vadd.f32 %v333, 1.0
        %v346 = vadd.f32 %v335, 1.0
        %v347 = vadd.f32 %v337, 1.0
        %v348 = vadd.f32 %v339, 1.0
        %v349 = vadd.f32 %v341, 1.0
        %v350 = vrcp.pop %v342
        %v351 = vmul.f32 %v342, %v350
        %v352 = vsub.f32 1.0, %v351
        %v353 = vmul.f32 %v350, %v352
        %v354 = vadd.f32 %v350, %v353
        %vm355 = vweird.f32 %v342
        %vm356 = vweird.f32 %v350
        %vm357 = vmor %vm355, %vm356
        %v358 = vsel %vm357, %v350, %v354
        %v359 = vand.u32 2147483647, %v342
        %vm360 = vcmp.eq.f32.partialorder %v359, 8.507059e+37
        %v361 = vand.u32 %v342, 2147483648
        %v362 = vor.u32 1.1754944e-38, %v361
        %v363 = vsel %vm360, %v362, %v358
        %v364 = vmul.f32 1.0, %v363
        %v365 = vrcp.pop %v343
        %v366 = vmul.f32 %v343, %v365
        %v367 = vsub.f32 1.0, %v366
        %v368 = vmul.f32 %v365, %v367
        %v369 = vadd.f32 %v365, %v368
        %vm370 = vweird.f32 %v343
        %vm371 = vweird.f32 %v365
        %vm372 = vmor %vm370, %vm371
        %v373 = vsel %vm372, %v365, %v369
        %v374 = vand.u32 2147483647, %v343
        %vm375 = vcmp.eq.f32.partialorder %v374, 8.507059e+37
        %v376 = vand.u32 %v343, 2147483648
        %v377 = vor.u32 1.1754944e-38, %v376
        %v378 = vsel %vm375, %v377, %v373
        %v379 = vmul.f32 1.0, %v378
        %v380 = vrcp.pop %v344
        %v381 = vmul.f32 %v344, %v380
        %v382 = vsub.f32 1.0, %v381
        %v383 = vmul.f32 %v380, %v382
        %v384 = vadd.f32 %v380, %v383
        %vm385 = vweird.f32 %v344
        %vm386 = vweird.f32 %v380
        %vm387 = vmor %vm385, %vm386
        %v388 = vsel %vm387, %v380, %v384
        %v389 = vand.u32 2147483647, %v344
        %vm390 = vcmp.eq.f32.partialorder %v389, 8.507059e+37
        %v391 = vand.u32 %v344, 2147483648
        %v392 = vor.u32 1.1754944e-38, %v391
        %v393 = vsel %vm390, %v392, %v388
        %v394 = vmul.f32 1.0, %v393
        %v395 = vrcp.pop %v345
        %v396 = vmul.f32 %v345, %v395
        %v397 = vsub.f32 1.0, %v396
        %v398 = vmul.f32 %v395, %v397
        %v399 = vadd.f32 %v395, %v398
        %vm400 = vweird.f32 %v345
        %vm401 = vweird.f32 %v395
        %vm402 = vmor %vm400, %vm401
        %v403 = vsel %vm402, %v395, %v399
        %v404 = vand.u32 2147483647, %v345
        %vm405 = vcmp.eq.f32.partialorder %v404, 8.507059e+37
        %v406 = vand.u32 %v345, 2147483648
        %v407 = vor.u32 1.1754944e-38, %v406
        %v408 = vsel %vm405, %v407, %v403
        %v409 = vmul.f32 1.0, %v408
        %v410 = vrcp.pop %v346
        %v411 = vmul.f32 %v346, %v410
        %v412 = vsub.f32 1.0, %v411
        %v413 = vmul.f32 %v410, %v412
        %v414 = vadd.f32 %v410, %v413
        %vm415 = vweird.f32 %v346
        %vm416 = vweird.f32 %v410
        %vm417 = vmor %vm415, %vm416
        %v418 = vsel %vm417, %v410, %v414
        %v419 = vand.u32 2147483647, %v346
        %vm420 = vcmp.eq.f32.partialorder %v419, 8.507059e+37
        %v421 = vand.u32 %v346, 2147483648
        %v422 = vor.u32 1.1754944e-38, %v421
        %v423 = vsel %vm420, %v422, %v418
        %v424 = vmul.f32 1.0, %v423
        %v425 = vrcp.pop %v347
        %v426 = vmul.f32 %v347, %v425
        %v427 = vsub.f32 1.0, %v426
        %v428 = vmul.f32 %v425, %v427
        %v429 = vadd.f32 %v425, %v428
        %vm430 = vweird.f32 %v347
        %vm431 = vweird.f32 %v425
        %vm432 = vmor %vm430, %vm431
        %v433 = vsel %vm432, %v425, %v429
        %v434 = vand.u32 2147483647, %v347
        %vm435 = vcmp.eq.f32.partialorder %v434, 8.507059e+37
        %v436 = vand.u32 %v347, 2147483648
        %v437 = vor.u32 1.1754944e-38, %v436
        %v438 = vsel %vm435, %v437, %v433
        %v439 = vmul.f32 1.0, %v438
        %v440 = vrcp.pop %v348
        %v441 = vmul.f32 %v348, %v440
        %v442 = vsub.f32 1.0, %v441
        %v443 = vmul.f32 %v440, %v442
        %v444 = vadd.f32 %v440, %v443
        %vm445 = vweird.f32 %v348
        %vm446 = vweird.f32 %v440
        %vm447 = vmor %vm445, %vm446
        %v448 = vsel %vm447, %v440, %v444
        %v449 = vand.u32 2147483647, %v348
        %vm450 = vcmp.eq.f32.partialorder %v449, 8.507059e+37
        %v451 = vand.u32 %v348, 2147483648
        %v452 = vor.u32 1.1754944e-38, %v451
        %v453 = vsel %vm450, %v452, %v448
        %v454 = vmul.f32 1.0, %v453
        %v455 = vrcp.pop %v349
        %v456 = vmul.f32 %v349, %v455
        %v457 = vsub.f32 1.0, %v456
        %v458 = vmul.f32 %v455, %v457
        %v459 = vadd.f32 %v455, %v458
        %vm460 = vweird.f32 %v349
        %vm461 = vweird.f32 %v455
        %vm462 = vmor %vm460, %vm461
        %v463 = vsel %vm462, %v455, %v459
        %v464 = vand.u32 2147483647, %v349
        %vm465 = vcmp.eq.f32.partialorder %v464, 8.507059e+37
        %v466 = vand.u32 %v349, 2147483648
        %v467 = vor.u32 1.1754944e-38, %v466
        %v468 = vsel %vm465, %v467, %v463
        %v469 = vmul.f32 1.0, %v468
        %v470 = vmul.f32 %v191, %v364
        %v471 = vmul.f32 %v192, %v364
        %v472 = vmul.f32 %v193, %v379
        %v473 = vmul.f32 %v194, %v379
        %v474 = vmul.f32 %v195, %v394
        %v475 = vmul.f32 %v196, %v394
        %v476 = vmul.f32 %v197, %v409
        %v477 = vmul.f32 %v198, %v409
        %v478 = vmul.f32 %v199, %v424
        %v479 = vmul.f32 %v200, %v424
        %v480 = vmul.f32 %v201, %v439
        %v481 = vmul.f32 %v202, %v439
        %v482 = vmul.f32 %v203, %v454
        %v483 = vmul.f32 %v204, %v454
        %v484 = vmul.f32 %v205, %v469
        %v485 = vmul.f32 %v206, %v469
        %486 = vst [vmem:[%s190] sm:$0xff] %v470
        %487 = vst [vmem:[%s190 + $0x8] sm:$0xff] %v471
        %488 = vst [vmem:[%s190 + $0x10] sm:$0xff] %v472
        %489 = vst [vmem:[%s190 + $0x18] sm:$0xff] %v473
        %490 = vst [vmem:[%s190 + $0x20] sm:$0xff] %v474
        %491 = vst [vmem:[%s190 + $0x28] sm:$0xff] %v475
        %492 = vst [vmem:[%s190 + $0x30] sm:$0xff] %v476
        %493 = vst [vmem:[%s190 + $0x38] sm:$0xff] %v477
        %494 = vst [vmem:[%s190 + $0x40] sm:$0xff] %v478
        %495 = vst [vmem:[%s190 + $0x48] sm:$0xff] %v479
        %496 = vst [vmem:[%s190 + $0x50] sm:$0xff] %v480
        %497 = vst [vmem:[%s190 + $0x58] sm:$0xff] %v481
        %498 = vst [vmem:[%s190 + $0x60] sm:$0xff] %v482
        %499 = vst [vmem:[%s190 + $0x68] sm:$0xff] %v483
        %500 = vst [vmem:[%s190 + $0x70] sm:$0xff] %v484
        %501 = vst [vmem:[%s190 + $0x78] sm:$0xff] %v485
        %s502 = sand.u32 %s96, 1
        %s503 = scalar_lea.sflag [#allocation4], %s502
        %s504 = sand.u32 %s96, 1
        %s505 = smul.addr %s504, 128
        %s506 = scalar_lea.vmem [#allocation5], %s505
        // Predicated region
        $region37: #{tpu_custom_call.1} parent=31 // pred_check
          %p507 = pneg %p106
        $region38: #{tpu_custom_call.1} parent=31 // pred_check_branch
          %509 = sbr.rel (%p507) target = $region40
        $region39: #{tpu_custom_call.1} parent=31 // pred_region
          %511 = vsyncadd %s503, 0
          %s512 = smul.addr %s20, 16
          %s513 = smul.addr %s512, 8
          %s514 = scalar_lea.hbm %s3, %s513
          %s515 = sshll.u32 %s506, 4
          %s516 = int_to_ptr.vmem [resolvable:$true] %s515
          %s517 = sshll.u32 %s514, 4
          %s518 = int_to_ptr.hbm [resolvable:$true] %s517
          %523 = dma.vmem_to_hbm [thread:$0]  %s516, 2048, %s518, %s503, 256, 256, 16
        $region40: #{tpu_custom_call.1} parent=31 // pred_fallthru
          _
      $region32: #{tpu_custom_call.1} parent=5 // pred_fallthru
        _
      %p524 = scmp.le.s32.totalorder 2, %s15
      // Predicated region
      $region41: #{tpu_custom_call.1} parent=5 // pred_check
        %p525 = pneg %p524
      $region42: #{tpu_custom_call.1} parent=5 // pred_check_branch
        %527 = sbr.rel (%p525) target = $region44
      $region43: #{tpu_custom_call.1} parent=5 // pred_region
        %s528 = ssub.s32 %s15, 2
        // Predicated region
        $region45: #{tpu_custom_call.1} parent=43 // pred_check
          %p529 = pneg %p112
        $region46: #{tpu_custom_call.1} parent=43 // pred_check_branch
          %531 = sbr.rel (%p529) target = $region48
        $region47: #{tpu_custom_call.1} parent=43 // pred_region
          %s532 = sand.u32 %s97, 1
          %s533 = scalar_lea.sflag [#allocation4], %s532
          %s534 = sand.u32 %s97, 1
          %s535 = smul.addr %s534, 128
          %s536 = scalar_lea.vmem [#allocation5], %s535
          %538 = dma.done %s533, 2048
        $region48: #{tpu_custom_call.1} parent=43 // pred_fallthru
          _
      $region44: #{tpu_custom_call.1} parent=5 // pred_fallthru
        _
    $region6: #{tpu_custom_call.1} parent=1 // loop_footer
      %s19 = sadd.s32 1, %s15
    $region7: #{tpu_custom_call.1} parent=1 // loop_footer_branch
      %14 = sbr.rel target = $region3
    $region8: #{tpu_custom_call.1} parent=1 // loop_exit
      _
    %539 = vsyncpa [#allocation3], 1
    %s540 = scalar_lea.sflag [#allocation3], 1
    %541 = vsyncpa %s540, 1
    %542 = vsyncpa [#allocation4], 1
    %s543 = scalar_lea.sflag [#allocation4], 1
    %544 = vsyncpa %s543, 1

</llo_original>
